<compile_context>
chip_gen: v7x
topology: tpu7x:2x2x1
jax: 0.10.0
libtpu: 0.0.40
codegen_flags: <defaults>
</compile_context>

<pallas_src>
import jax
import jax.numpy as jnp
import numpy as np
from jax import lax
from jax.experimental import pallas as pl
from jax.experimental.pallas import tpu as pltpu

# demo problem size (matches the small example input below)
N, H, W = 2, 16, 16
C_IN, C_MID = 3, 8
H1, H2 = 16, 4
EPS = 1e-5                      # torch BatchNorm2d default eps

_VMEM = pl.BlockSpec(memory_space=pltpu.MemorySpace.VMEM)


# ---------------------------------------------------------------------------
# Pallas kernel: the entire network, VMEM-resident
# ---------------------------------------------------------------------------
def fused_net_kernel(x_ref, wcat_ref, gb_ref, wh_ref, bh_ref, o_ref):
    # x:    (N*H, W*C)       activation slab, lane = w*C + c (C_IN zero-padded to C_MID)
    # wcat: (2, 3*W*C, W*C)  bf16 block conv weights, kh taps stacked along K
    #                        (W-direction zero padding folded in on the host)
    # gb:   (4, W*C)         [gamma1, beta1, gamma2, beta2] tiled onto the lane layout
    # wh:   (W*C, 4)         global-avg-pool + dense1 + dense2 folded;  bh: (1, 4)
    nh, wc = x_ref.shape
    n = nh // H
    inv_cnt = 1.0 / float(nh * W)                   # 1 / (N*H*W)

    # Sample-boundary masks for the +/-1 row shifts: rows whose rolled source
    # crosses a sample boundary are zeroed (== H-direction zero padding).
    row = lax.broadcasted_iota(jnp.int32, (nh, wc), 0)
    rmod = row % H
    mtop = (rmod > 0).astype(jnp.float32)           # keep "row r-1" source
    mbot = (rmod < H - 1).astype(jnp.float32)       # keep "row r+1" source

    def conv3x3(a, w_cat):
        # 3x3 "same" conv as ONE MXU matmul: the three kh taps are handled by
        # concatenating [rolled-up, identity, rolled-down] activations along K
        # (XLU roll + VPU mask), W padding is already folded into w_cat.
        a_up = pltpu.roll(a, shift=1, axis=0) * mtop        # row r <- row r-1
        a_dn = pltpu.roll(a, shift=nh - 1, axis=0) * mbot   # row r <- row r+1
        a_cat = jnp.concatenate([a_up, a, a_dn], axis=1).astype(jnp.bfloat16)
        return jnp.dot(a_cat, w_cat, preferred_element_type=jnp.float32)

    def bn_tanh(y, gamma, beta):
        # training-mode BatchNorm (biased batch stats over all N*H*W positions),
        # single pass; conv bias omitted (cancelled exactly by mean subtraction).
        s = jnp.sum(y, axis=0, keepdims=True)               # (1, W*C)
        ss = jnp.sum(y * y, axis=0, keepdims=True)
        stats = jnp.concatenate([s, ss], axis=0)             # (2, W*C)
        # per-channel all-reduce across the W lane groups: log2(W) strided rolls
        shift = C_MID
        while shift < wc:
            stats = stats + pltpu.roll(stats, shift=shift, axis=1)
            shift *= 2
        stats = stats * inv_cnt
        mean, ex2 = stats[0:1, :], stats[1:2, :]
        var = jnp.maximum(ex2 - mean * mean, 0.0)
        scl = gamma * lax.rsqrt(var + EPS)
        sft = beta - mean * scl
        return jnp.tanh(y * scl + sft)

    gb = gb_ref[...]
    g1, b1, g2, b2 = gb[0:1], gb[1:2], gb[2:3], gb[3:4]
    w1 = wcat_ref[0]
    w2 = wcat_ref[1]

    a = bn_tanh(conv3x3(x_ref[...], w1), g1, b1)    # conv1 + bn1 + tanh
    a = bn_tanh(conv3x3(a, w2), g2, b2)             # conv2 + bn2 + tanh
    a = bn_tanh(conv3x3(a, w2), g2, b2)             # conv2 + bn2 + tanh (again)

    # global average pool (sublane sum; 1/(H*W) folded into wh) + dense1.dense2
    pooled = jnp.sum(a.reshape(n, H, wc), axis=1)   # (N, W*C)
    o_ref[...] = jnp.dot(pooled, wh_ref[...],
                         preferred_element_type=jnp.float32) + bh_ref[...]


# ---------------------------------------------------------------------------
# Wrapper (glue)
# ---------------------------------------------------------------------------
def forward(x_nchw, prep):
    n, c, h, w = x_nchw.shape
    # layout glue: NCHW -> NHWC, zero-pad channels to C_MID, -> (N*H, W*C_MID) slab
    xs = jnp.transpose(x_nchw, (0, 2, 3, 1)).astype(jnp.float32)
    xs = jnp.pad(xs, ((0, 0), (0, 0), (0, 0), (0, C_MID - c)))
    xs = xs.reshape(n * h, w * C_MID)
    out_dim = prep["w_head"].shape[1]
    return pl.pallas_call(
        fused_net_kernel,
        out_shape=jax.ShapeDtypeStruct((n, out_dim), jnp.float32),
        in_specs=[_VMEM] * 5,
        out_specs=_VMEM,
        # real footprint is well under 1 MiB; keep a small documented budget
        compiler_params=pltpu.CompilerParams(vmem_limit_bytes=4 * 1024 * 1024),
    )(xs, prep["wcat"], prep["gb"], prep["w_head"], prep["b_head"])


# ---------------------------------------------------------------------------
# One-off host-side parameter preprocessing (pure glue, outside jit)
# ---------------------------------------------------------------------------
def prepare_params(params, n=N, h=H, w=W):
    # conv weights in (kh, kw, cin, cout) order (permute real torch
    # (cout, cin, kh, kw) weights with .transpose(2, 3, 1, 0) when loading)
    w1 = np.asarray(params["w1"], np.float32)          # (3, 3, C_IN,  C_MID)
    w2 = np.asarray(params["w2"], np.float32)          # (3, 3, C_MID, C_MID)
    c_mid = w2.shape[3]

    def block_conv_kcat(wt, cin_pad):
        # Fold the W-direction zero padding into the weights, pad cin up to
        # cin_pad lanes, and stack the 3 kh taps along K to match the kernel's
        # [row r-1 | row r | row r+1] K-concatenation.
        kh, kw, cin, cout = wt.shape
        wb = np.zeros((kh, w * cin_pad, w * cout), np.float32)
        for dh in range(kh):
            for dw in range(kw):
                for wo in range(w):
                    wi = wo + dw - 1
                    if 0 <= wi < w:                    # W zero-padding folded in
                        wb[dh, wi * cin_pad:wi * cin_pad + cin,
                           wo * cout:(wo + 1) * cout] = wt[dh, dw]
        return wb.reshape(kh * w * cin_pad, w * cout)

    wb1 = block_conv_kcat(w1, c_mid)                   # (3*W*C, W*C), cin padded to C_MID
    wb2 = block_conv_kcat(w2, c_mid)                   # (3*W*C, W*C)
    wcat = jnp.asarray(np.stack([wb1, wb2]), jnp.bfloat16)   # (2, 384, 128) bf16

    def lane_tile(v):                                  # (C,) -> (W*C,), lane = w*C + c
        return np.tile(np.asarray(v, np.float32).reshape(-1), w)

    gb = jnp.asarray(np.stack([lane_tile(params["g1"]), lane_tile(params["beta1"]),
                               lane_tile(params["g2"]), lane_tile(params["beta2"])]))

    wd1 = np.asarray(params["wd1"], np.float32)
    bd1 = np.asarray(params["bd1"], np.float32)
    wd2 = np.asarray(params["wd2"], np.float32)
    bd2 = np.asarray(params["bd2"], np.float32)
    wd = wd1 @ wd2                                     # dense1 . dense2 folded (no nonlinearity between)
    w_head = np.tile(wd, (w, 1)) / float(h * w)        # global-avg-pool folded in, (W*C, 4)
    b_head = bd1 @ wd2 + bd2                           # (1, 4)

    # conv biases params["b1"]/["b2"] intentionally unused: training-mode
    # BatchNorm's mean subtraction cancels them exactly.
    # TODO(synk): eval-mode BatchNorm (running_mean/var + running-stat updates)
    # is not emulated; this kernel implements training-mode batch statistics.
    return {"wcat": wcat, "gb": gb,
            "w_head": jnp.asarray(w_head), "b_head": jnp.asarray(b_head)}


def make_params(key, c_in=C_IN, c_mid=C_MID, h1=H1, h2=H2, k=3):
    ks = jax.random.split(key, 8)
    s = 0.1
    return {
        # conv weights in (kh, kw, cin, cout) order (see prepare_params for the
        # permutation needed when loading real torch (cout, cin, kh, kw) weights)
        "w1": s * jax.random.normal(ks[0], (k, k, c_in, c_mid), jnp.float32),
        "b1": s * jax.random.normal(ks[1], (c_mid,), jnp.float32),   # cancelled by BN (unused)
        "g1": jnp.ones((c_mid,), jnp.float32),
        "beta1": jnp.zeros((c_mid,), jnp.float32),
        "w2": s * jax.random.normal(ks[2], (k, k, c_mid, c_mid), jnp.float32),
        "b2": s * jax.random.normal(ks[3], (c_mid,), jnp.float32),   # cancelled by BN (unused)
        "g2": jnp.ones((c_mid,), jnp.float32),
        "beta2": jnp.zeros((c_mid,), jnp.float32),
        "wd1": s * jax.random.normal(ks[4], (c_mid, h1), jnp.float32),
        "bd1": s * jax.random.normal(ks[5], (1, h1), jnp.float32),
        "wd2": s * jax.random.normal(ks[6], (h1, h2), jnp.float32),
        "bd2": s * jax.random.normal(ks[7], (1, h2), jnp.float32),
    }


if __name__ == "__main__":
    key_x, key_p = jax.random.split(jax.random.PRNGKey(0))
    x = jax.random.normal(key_x, (N, C_IN, H, W), jnp.float32)   # NCHW, like the torch input
    params = make_params(key_p)
    prep = prepare_params(params)

    out = jax.block_until_ready(jax.jit(forward)(x, prep))
    assert out.shape == (N, H2), out.shape
    assert bool(jnp.all(jnp.isfinite(out))), "non-finite output"
    print("KERNEL_OK")
</pallas_src>

<mosaic_0001>
module attributes {stable_mosaic.version = 11 : i64} {
  func.func @fused_net_kernel(%arg0: memref<32x128xf32, #tpu.memory_space<vmem>>, %arg1: memref<2x384x128xbf16, #tpu.memory_space<vmem>>, %arg2: memref<4x128xf32, #tpu.memory_space<vmem>>, %arg3: memref<128x4xf32, #tpu.memory_space<vmem>>, %arg4: memref<1x4xf32, #tpu.memory_space<vmem>>, %arg5: memref<2x4xf32, #tpu.memory_space<vmem>>) attributes {dimension_semantics = [], scalar_prefetch = 0 : i64, scratch_operands = 0 : i64, tpu.core_type = #tpu.core_type<tc>} {
    %0 = tpu.iota {dimensions = array<i32: 0>} : vector<32x128xi32>
    %c16_i32 = arith.constant 16 : i32
    %c0_i32 = arith.constant 0 : i32
    %1 = arith.cmpi eq, %c16_i32, %c0_i32 : i32
    %c1_i32 = arith.constant 1 : i32
    %2 = arith.select %1, %c1_i32, %c16_i32 : i32
    %3 = vector.broadcast %2 : i32 to vector<32x128xi32>
    %4 = arith.remsi %0, %3 : vector<32x128xi32>
    %c0_i32_0 = arith.constant 0 : i32
    %5 = vector.broadcast %c0_i32_0 : i32 to vector<32x128xi32>
    %6 = arith.cmpi ne, %4, %5 : vector<32x128xi32>
    %c0_i32_1 = arith.constant 0 : i32
    %7 = vector.broadcast %c0_i32_1 : i32 to vector<32x128xi32>
    %8 = arith.cmpi slt, %4, %7 : vector<32x128xi32>
    %c0_i32_2 = arith.constant 0 : i32
    %9 = arith.cmpi slt, %2, %c0_i32_2 : i32
    %10 = vector.broadcast %9 : i1 to vector<32x128xi1>
    %11 = vector.broadcast %10 : vector<32x128xi1> to vector<32x128xi1>
    %12 = arith.xori %8, %11 : vector<32x128xi1>
    %13 = arith.andi %12, %6 : vector<32x128xi1>
    %14 = vector.broadcast %2 : i32 to vector<32x128xi32>
    %15 = arith.addi %4, %14 : vector<32x128xi32>
    %16 = arith.select %13, %15, %4 : vector<32x128xi1>, vector<32x128xi32>
    %c0_i32_3 = arith.constant 0 : i32
    %17 = vector.broadcast %c0_i32_3 : i32 to vector<32x128xi32>
    %18 = arith.cmpi sgt, %16, %17 : vector<32x128xi32>
    %19 = arith.extui %18 : vector<32x128xi1> to vector<32x128xi32>
    %20 = arith.sitofp %19 : vector<32x128xi32> to vector<32x128xf32>
    %c15_i32 = arith.constant 15 : i32
    %21 = vector.broadcast %c15_i32 : i32 to vector<32x128xi32>
    %22 = arith.cmpi slt, %16, %21 : vector<32x128xi32>
    %23 = arith.extui %22 : vector<32x128xi1> to vector<32x128xi32>
    %24 = arith.sitofp %23 : vector<32x128xi32> to vector<32x128xf32>
    %c0 = arith.constant 0 : index
    %c0_4 = arith.constant 0 : index
    %25 = vector.load %arg2[%c0, %c0_4] : memref<4x128xf32, #tpu.memory_space<vmem>>, vector<4x128xf32>
    %26 = vector.extract_strided_slice %25 {offsets = [0, 0], sizes = [1, 128], strides = [1, 1]} : vector<4x128xf32> to vector<1x128xf32>
    %27 = vector.extract_strided_slice %25 {offsets = [1, 0], sizes = [1, 128], strides = [1, 1]} : vector<4x128xf32> to vector<1x128xf32>
    %28 = vector.extract_strided_slice %25 {offsets = [2, 0], sizes = [1, 128], strides = [1, 1]} : vector<4x128xf32> to vector<1x128xf32>
    %29 = vector.extract_strided_slice %25 {offsets = [3, 0], sizes = [1, 128], strides = [1, 1]} : vector<4x128xf32> to vector<1x128xf32>
    %c0_5 = arith.constant 0 : index
    %c0_6 = arith.constant 0 : index
    %c0_7 = arith.constant 0 : index
    %30 = vector.load %arg1[%c0_5, %c0_6, %c0_7] : memref<2x384x128xbf16, #tpu.memory_space<vmem>>, vector<1x384x128xbf16>
    %31 = vector.shape_cast %30 : vector<1x384x128xbf16> to vector<384x128xbf16>
    %c1 = arith.constant 1 : index
    %c0_8 = arith.constant 0 : index
    %c0_9 = arith.constant 0 : index
    %32 = vector.load %arg1[%c1, %c0_8, %c0_9] : memref<2x384x128xbf16, #tpu.memory_space<vmem>>, vector<1x384x128xbf16>
    %33 = vector.shape_cast %32 : vector<1x384x128xbf16> to vector<384x128xbf16>
    %c0_10 = arith.constant 0 : index
    %c0_11 = arith.constant 0 : index
    %34 = vector.load %arg0[%c0_10, %c0_11] : memref<32x128xf32, #tpu.memory_space<vmem>>, vector<32x128xf32>
    %c1_i32_12 = arith.constant 1 : i32
    %35 = tpu.dynamic_rotate %34 by %c1_i32_12 dim 0 : vector<32x128xf32>, i32 -> vector<32x128xf32>
    %36 = arith.mulf %35, %20 : vector<32x128xf32>
    %c31_i32 = arith.constant 31 : i32
    %37 = tpu.dynamic_rotate %34 by %c31_i32 dim 0 : vector<32x128xf32>, i32 -> vector<32x128xf32>
    %38 = arith.mulf %37, %24 : vector<32x128xf32>
    %39 = tpu.concatenate %36, %34, %38 in 1 : vector<32x128xf32>, vector<32x128xf32>, vector<32x128xf32> -> vector<32x384xf32>
    %40 = arith.truncf %39 : vector<32x384xf32> to vector<32x384xbf16>
    %cst = arith.constant dense<0.000000e+00> : vector<32x128xf32>
    %41 = tpu.matmul %40, %31, %cst {dimension_numbers = #tpu.dot_dimension_numbers<[1], [0], [0], [1], [0, 0, 1, 1], [], []>} : vector<32x384xbf16>, vector<384x128xbf16>, vector<32x128xf32> -> vector<32x128xf32>
    %cst_13 = arith.constant dense<0.000000e+00> : vector<128xf32>
    %42 = vector.multi_reduction <add>, %41, %cst_13 [0] : vector<32x128xf32> to vector<128xf32>
    %43 = vector.shape_cast %42 : vector<128xf32> to vector<1x128xf32>
    %44 = arith.mulf %41, %41 : vector<32x128xf32>
    %cst_14 = arith.constant dense<0.000000e+00> : vector<128xf32>
    %45 = vector.multi_reduction <add>, %44, %cst_14 [0] : vector<32x128xf32> to vector<128xf32>
    %46 = vector.shape_cast %45 : vector<128xf32> to vector<1x128xf32>
    %47 = tpu.concatenate %43, %46 in 0 : vector<1x128xf32>, vector<1x128xf32> -> vector<2x128xf32>
    %c8_i32 = arith.constant 8 : i32
    %48 = tpu.dynamic_rotate %47 by %c8_i32 dim 1 : vector<2x128xf32>, i32 -> vector<2x128xf32>
    %49 = arith.addf %47, %48 : vector<2x128xf32>
    %c16_i32_15 = arith.constant 16 : i32
    %50 = tpu.dynamic_rotate %49 by %c16_i32_15 dim 1 : vector<2x128xf32>, i32 -> vector<2x128xf32>
    %51 = arith.addf %49, %50 : vector<2x128xf32>
    %c32_i32 = arith.constant 32 : i32
    %52 = tpu.dynamic_rotate %51 by %c32_i32 dim 1 : vector<2x128xf32>, i32 -> vector<2x128xf32>
    %53 = arith.addf %51, %52 : vector<2x128xf32>
    %c64_i32 = arith.constant 64 : i32
    %54 = tpu.dynamic_rotate %53 by %c64_i32 dim 1 : vector<2x128xf32>, i32 -> vector<2x128xf32>
    %55 = arith.addf %53, %54 : vector<2x128xf32>
    %cst_16 = arith.constant 0.001953125 : f32
    %56 = vector.broadcast %cst_16 : f32 to vector<2x128xf32>
    %57 = arith.mulf %55, %56 : vector<2x128xf32>
    %58 = vector.extract_strided_slice %57 {offsets = [0, 0], sizes = [1, 128], strides = [1, 1]} : vector<2x128xf32> to vector<1x128xf32>
    %59 = vector.extract_strided_slice %57 {offsets = [1, 0], sizes = [1, 128], strides = [1, 1]} : vector<2x128xf32> to vector<1x128xf32>
    %60 = arith.mulf %58, %58 : vector<1x128xf32>
    %61 = arith.subf %59, %60 : vector<1x128xf32>
    %cst_17 = arith.constant 0.000000e+00 : f32
    %62 = vector.broadcast %cst_17 : f32 to vector<1x128xf32>
    %63 = arith.maximumf %61, %62 : vector<1x128xf32>
    %cst_18 = arith.constant 9.99999974E-6 : f32
    %64 = vector.broadcast %cst_18 : f32 to vector<1x128xf32>
    %65 = arith.addf %63, %64 : vector<1x128xf32>
    %66 = math.rsqrt %65 : vector<1x128xf32>
    %67 = arith.mulf %26, %66 : vector<1x128xf32>
    %68 = arith.mulf %58, %67 : vector<1x128xf32>
    %69 = arith.subf %27, %68 : vector<1x128xf32>
    %70 = vector.broadcast %67 : vector<1x128xf32> to vector<32x128xf32>
    %71 = arith.mulf %41, %70 : vector<32x128xf32>
    %72 = vector.broadcast %69 : vector<1x128xf32> to vector<32x128xf32>
    %73 = arith.addf %71, %72 : vector<32x128xf32>
    %74 = math.tanh %73 : vector<32x128xf32>
    %c1_i32_19 = arith.constant 1 : i32
    %75 = tpu.dynamic_rotate %74 by %c1_i32_19 dim 0 : vector<32x128xf32>, i32 -> vector<32x128xf32>
    %76 = arith.mulf %75, %20 : vector<32x128xf32>
    %c31_i32_20 = arith.constant 31 : i32
    %77 = tpu.dynamic_rotate %74 by %c31_i32_20 dim 0 : vector<32x128xf32>, i32 -> vector<32x128xf32>
    %78 = arith.mulf %77, %24 : vector<32x128xf32>
    %79 = tpu.concatenate %76, %74, %78 in 1 : vector<32x128xf32>, vector<32x128xf32>, vector<32x128xf32> -> vector<32x384xf32>
    %80 = arith.truncf %79 : vector<32x384xf32> to vector<32x384xbf16>
    %cst_21 = arith.constant dense<0.000000e+00> : vector<32x128xf32>
    %81 = tpu.matmul %80, %33, %cst_21 {dimension_numbers = #tpu.dot_dimension_numbers<[1], [0], [0], [1], [0, 0, 1, 1], [], []>} : vector<32x384xbf16>, vector<384x128xbf16>, vector<32x128xf32> -> vector<32x128xf32>
    %cst_22 = arith.constant dense<0.000000e+00> : vector<128xf32>
    %82 = vector.multi_reduction <add>, %81, %cst_22 [0] : vector<32x128xf32> to vector<128xf32>
    %83 = vector.shape_cast %82 : vector<128xf32> to vector<1x128xf32>
    %84 = arith.mulf %81, %81 : vector<32x128xf32>
    %cst_23 = arith.constant dense<0.000000e+00> : vector<128xf32>
    %85 = vector.multi_reduction <add>, %84, %cst_23 [0] : vector<32x128xf32> to vector<128xf32>
    %86 = vector.shape_cast %85 : vector<128xf32> to vector<1x128xf32>
    %87 = tpu.concatenate %83, %86 in 0 : vector<1x128xf32>, vector<1x128xf32> -> vector<2x128xf32>
    %c8_i32_24 = arith.constant 8 : i32
    %88 = tpu.dynamic_rotate %87 by %c8_i32_24 dim 1 : vector<2x128xf32>, i32 -> vector<2x128xf32>
    %89 = arith.addf %87, %88 : vector<2x128xf32>
    %c16_i32_25 = arith.constant 16 : i32
    %90 = tpu.dynamic_rotate %89 by %c16_i32_25 dim 1 : vector<2x128xf32>, i32 -> vector<2x128xf32>
    %91 = arith.addf %89, %90 : vector<2x128xf32>
    %c32_i32_26 = arith.constant 32 : i32
    %92 = tpu.dynamic_rotate %91 by %c32_i32_26 dim 1 : vector<2x128xf32>, i32 -> vector<2x128xf32>
    %93 = arith.addf %91, %92 : vector<2x128xf32>
    %c64_i32_27 = arith.constant 64 : i32
    %94 = tpu.dynamic_rotate %93 by %c64_i32_27 dim 1 : vector<2x128xf32>, i32 -> vector<2x128xf32>
    %95 = arith.addf %93, %94 : vector<2x128xf32>
    %cst_28 = arith.constant 0.001953125 : f32
    %96 = vector.broadcast %cst_28 : f32 to vector<2x128xf32>
    %97 = arith.mulf %95, %96 : vector<2x128xf32>
    %98 = vector.extract_strided_slice %97 {offsets = [0, 0], sizes = [1, 128], strides = [1, 1]} : vector<2x128xf32> to vector<1x128xf32>
    %99 = vector.extract_strided_slice %97 {offsets = [1, 0], sizes = [1, 128], strides = [1, 1]} : vector<2x128xf32> to vector<1x128xf32>
    %100 = arith.mulf %98, %98 : vector<1x128xf32>
    %101 = arith.subf %99, %100 : vector<1x128xf32>
    %cst_29 = arith.constant 0.000000e+00 : f32
    %102 = vector.broadcast %cst_29 : f32 to vector<1x128xf32>
    %103 = arith.maximumf %101, %102 : vector<1x128xf32>
    %cst_30 = arith.constant 9.99999974E-6 : f32
    %104 = vector.broadcast %cst_30 : f32 to vector<1x128xf32>
    %105 = arith.addf %103, %104 : vector<1x128xf32>
    %106 = math.rsqrt %105 : vector<1x128xf32>
    %107 = arith.mulf %28, %106 : vector<1x128xf32>
    %108 = arith.mulf %98, %107 : vector<1x128xf32>
    %109 = arith.subf %29, %108 : vector<1x128xf32>
    %110 = vector.broadcast %107 : vector<1x128xf32> to vector<32x128xf32>
    %111 = arith.mulf %81, %110 : vector<32x128xf32>
    %112 = vector.broadcast %109 : vector<1x128xf32> to vector<32x128xf32>
    %113 = arith.addf %111, %112 : vector<32x128xf32>
    %114 = math.tanh %113 : vector<32x128xf32>
    %c1_i32_31 = arith.constant 1 : i32
    %115 = tpu.dynamic_rotate %114 by %c1_i32_31 dim 0 : vector<32x128xf32>, i32 -> vector<32x128xf32>
    %116 = arith.mulf %115, %20 : vector<32x128xf32>
    %c31_i32_32 = arith.constant 31 : i32
    %117 = tpu.dynamic_rotate %114 by %c31_i32_32 dim 0 : vector<32x128xf32>, i32 -> vector<32x128xf32>
    %118 = arith.mulf %117, %24 : vector<32x128xf32>
    %119 = tpu.concatenate %116, %114, %118 in 1 : vector<32x128xf32>, vector<32x128xf32>, vector<32x128xf32> -> vector<32x384xf32>
    %120 = arith.truncf %119 : vector<32x384xf32> to vector<32x384xbf16>
    %cst_33 = arith.constant dense<0.000000e+00> : vector<32x128xf32>
    %121 = tpu.matmul %120, %33, %cst_33 {dimension_numbers = #tpu.dot_dimension_numbers<[1], [0], [0], [1], [0, 0, 1, 1], [], []>} : vector<32x384xbf16>, vector<384x128xbf16>, vector<32x128xf32> -> vector<32x128xf32>
    %cst_34 = arith.constant dense<0.000000e+00> : vector<128xf32>
    %122 = vector.multi_reduction <add>, %121, %cst_34 [0] : vector<32x128xf32> to vector<128xf32>
    %123 = vector.shape_cast %122 : vector<128xf32> to vector<1x128xf32>
    %124 = arith.mulf %121, %121 : vector<32x128xf32>
    %cst_35 = arith.constant dense<0.000000e+00> : vector<128xf32>
    %125 = vector.multi_reduction <add>, %124, %cst_35 [0] : vector<32x128xf32> to vector<128xf32>
    %126 = vector.shape_cast %125 : vector<128xf32> to vector<1x128xf32>
    %127 = tpu.concatenate %123, %126 in 0 : vector<1x128xf32>, vector<1x128xf32> -> vector<2x128xf32>
    %c8_i32_36 = arith.constant 8 : i32
    %128 = tpu.dynamic_rotate %127 by %c8_i32_36 dim 1 : vector<2x128xf32>, i32 -> vector<2x128xf32>
    %129 = arith.addf %127, %128 : vector<2x128xf32>
    %c16_i32_37 = arith.constant 16 : i32
    %130 = tpu.dynamic_rotate %129 by %c16_i32_37 dim 1 : vector<2x128xf32>, i32 -> vector<2x128xf32>
    %131 = arith.addf %129, %130 : vector<2x128xf32>
    %c32_i32_38 = arith.constant 32 : i32
    %132 = tpu.dynamic_rotate %131 by %c32_i32_38 dim 1 : vector<2x128xf32>, i32 -> vector<2x128xf32>
    %133 = arith.addf %131, %132 : vector<2x128xf32>
    %c64_i32_39 = arith.constant 64 : i32
    %134 = tpu.dynamic_rotate %133 by %c64_i32_39 dim 1 : vector<2x128xf32>, i32 -> vector<2x128xf32>
    %135 = arith.addf %133, %134 : vector<2x128xf32>
    %cst_40 = arith.constant 0.001953125 : f32
    %136 = vector.broadcast %cst_40 : f32 to vector<2x128xf32>
    %137 = arith.mulf %135, %136 : vector<2x128xf32>
    %138 = vector.extract_strided_slice %137 {offsets = [0, 0], sizes = [1, 128], strides = [1, 1]} : vector<2x128xf32> to vector<1x128xf32>
    %139 = vector.extract_strided_slice %137 {offsets = [1, 0], sizes = [1, 128], strides = [1, 1]} : vector<2x128xf32> to vector<1x128xf32>
    %140 = arith.mulf %138, %138 : vector<1x128xf32>
    %141 = arith.subf %139, %140 : vector<1x128xf32>
    %cst_41 = arith.constant 0.000000e+00 : f32
    %142 = vector.broadcast %cst_41 : f32 to vector<1x128xf32>
    %143 = arith.maximumf %141, %142 : vector<1x128xf32>
    %cst_42 = arith.constant 9.99999974E-6 : f32
    %144 = vector.broadcast %cst_42 : f32 to vector<1x128xf32>
    %145 = arith.addf %143, %144 : vector<1x128xf32>
    %146 = math.rsqrt %145 : vector<1x128xf32>
    %147 = arith.mulf %28, %146 : vector<1x128xf32>
    %148 = arith.mulf %138, %147 : vector<1x128xf32>
    %149 = arith.subf %29, %148 : vector<1x128xf32>
    %150 = vector.broadcast %147 : vector<1x128xf32> to vector<32x128xf32>
    %151 = arith.mulf %121, %150 : vector<32x128xf32>
    %152 = vector.broadcast %149 : vector<1x128xf32> to vector<32x128xf32>
    %153 = arith.addf %151, %152 : vector<32x128xf32>
    %154 = math.tanh %153 : vector<32x128xf32>
    %155 = vector.shape_cast %154 : vector<32x128xf32> to vector<2x16x128xf32>
    %cst_43 = arith.constant dense<0.000000e+00> : vector<2x128xf32>
    %156 = vector.multi_reduction <add>, %155, %cst_43 [1] : vector<2x16x128xf32> to vector<2x128xf32>
    %c0_44 = arith.constant 0 : index
    %c0_45 = arith.constant 0 : index
    %157 = vector.load %arg3[%c0_44, %c0_45] : memref<128x4xf32, #tpu.memory_space<vmem>>, vector<128x4xf32>
    %cst_46 = arith.constant dense<0.000000e+00> : vector<2x4xf32>
    %158 = tpu.matmul %156, %157, %cst_46 {dimension_numbers = #tpu.dot_dimension_numbers<[1], [0], [0], [1], [0, 0, 1, 1], [], []>} : vector<2x128xf32>, vector<128x4xf32>, vector<2x4xf32> -> vector<2x4xf32>
    %c0_47 = arith.constant 0 : index
    %c0_48 = arith.constant 0 : index
    %159 = vector.load %arg4[%c0_47, %c0_48] : memref<1x4xf32, #tpu.memory_space<vmem>>, vector<1x4xf32>
    %160 = vector.broadcast %159 : vector<1x4xf32> to vector<2x4xf32>
    %161 = arith.addf %158, %160 : vector<2x4xf32>
    %c0_49 = arith.constant 0 : index
    %c0_50 = arith.constant 0 : index
    %162 = vector.load %arg5[%c0_49, %c0_50] : memref<2x4xf32, #tpu.memory_space<vmem>>, vector<2x4xf32>
    tpu.vector_store %arg5[%c0_49, %c0_50], %161 {strides = array<i32>} : memref<2x4xf32, #tpu.memory_space<vmem>>, vector<2x4xf32>,
    return
  }
}

</mosaic_0001>

<llo_original>
// kernel: forward.1
$region0: #{forward.1}
  #allocation0 [shape = 'u32[]', space=smem, size = 0x4, offset = 0x4, fixed_abs, tag = 'smem constant byte address 0x4 - core index']
  #allocation1 [shape = 'u32[144,128]{1,0:T(1,128)}', space=vmem, size = 0x12000, scoped, tag = 'internal scratch']
  %s0 = inlined_call_operand.vmem [shape: f32[32,128], index: 0, kind: input, shape index: {}]
  %s1 = inlined_call_operand.vmem [shape: bf16[2,384,128], index: 1, kind: input, shape index: {}]
  %s2 = inlined_call_operand.vmem [shape: f32[4,128], index: 2, kind: input, shape index: {}]
  %s3 = inlined_call_operand.vmem [shape: f32[128,4], index: 3, kind: input, shape index: {}]
  %s4 = inlined_call_operand.vmem [shape: f32[1,4], index: 4, kind: input, shape index: {}]
  %s5 = inlined_call_operand.hbm [shape: f32[2,4], index: 5, kind: output, shape index: {}]
  %s6 = sld [smem:[#allocation0]]
  $region30: #{forward.1} parent=0
    _
  %s8 = ssub.s32 1, %s6
  %s9 = scalar_select 0, %s8, %s6
  $region1: #{forward.1} parent=0
    #allocation2 [shape = 'u8[1024]{0}', space=vmem, size = 0x400, scoped, tag = 'output window, operand 0, single buffered']
    #allocation3 [shape = 's32[1]{0}', space=sflag, size = 0x4, scoped, tag = 'scoped memory for forward.1']
    %10 = vsyncpa [#allocation3], 0
    // Predicated region
    $region2: #{forward.1} parent=1 // pred_check
      _
    $region3: #{forward.1} parent=1 // pred_check_branch
      %12 = sbr.rel (0) target = $region5
    $region4: #{forward.1} parent=1 // pred_region
      _
    $region5: #{forward.1} parent=1 // pred_fallthru
      _
    // Predicated region
    $region6: #{forward.1} parent=1 // pred_check
      _
    $region7: #{forward.1} parent=1 // pred_check_branch
      %14 = sbr.rel (0) target = $region9
    $region8: #{forward.1} parent=1 // pred_region
      _
    $region9: #{forward.1} parent=1 // pred_fallthru
      _
    // Predicated region
    $region10: #{forward.1} parent=1 // pred_check
      _
    $region11: #{forward.1} parent=1 // pred_check_branch
      %16 = sbr.rel (0) target = $region13
    $region12: #{forward.1} parent=1 // pred_region
      _
    $region13: #{forward.1} parent=1 // pred_fallthru
      _
    // Predicated region
    $region14: #{forward.1} parent=1 // pred_check
      _
    $region15: #{forward.1} parent=1 // pred_check_branch
      %18 = sbr.rel (0) target = $region17
    $region16: #{forward.1} parent=1 // pred_region
      _
    $region17: #{forward.1} parent=1 // pred_fallthru
      _
    // Predicated region
    $region18: #{forward.1} parent=1 // pred_check
      _
    $region19: #{forward.1} parent=1 // pred_check_branch
      %20 = sbr.rel (0) target = $region21
    $region20: #{forward.1} parent=1 // pred_region
      _
    $region21: #{forward.1} parent=1 // pred_fallthru
      _
    %v22 = vlaneseq
    %v23 = vshrl.u32 %v22, 7
    %v24 = vadd.s32 %v23, 8
    %v25 = vadd.s32 %v23, 16
    %v26 = vadd.s32 %v23, 24
    %vm27 = vcmp.lt.s32.totalorder %v23, 0
    %v28 = vsub.s32 0, %v23
    %v29 = vsel %vm27, %v28, %v23
    %v30 = vshrl.u32 %v29, 4
    %v31 = vand.u32 %v29, 15
    %v32 = vsub.s32 0, %v31
    %v33 = vsel %vm27, %v32, %v31
    %vm34 = vcmp.lt.s32.totalorder %v24, 0
    %v35 = vsub.s32 0, %v24
    %v36 = vsel %vm34, %v35, %v24
    %v37 = vshrl.u32 %v36, 4
    %v38 = vand.u32 %v36, 15
    %v39 = vsub.s32 0, %v38
    %v40 = vsel %vm34, %v39, %v38
    %vm41 = vcmp.lt.s32.totalorder %v25, 0
    %v42 = vsub.s32 0, %v25
    %v43 = vsel %vm41, %v42, %v25
    %v44 = vshrl.u32 %v43, 4
    %v45 = vand.u32 %v43, 15
    %v46 = vsub.s32 0, %v45
    %v47 = vsel %vm41, %v46, %v45
    %vm48 = vcmp.lt.s32.totalorder %v26, 0
    %v49 = vsub.s32 0, %v26
    %v50 = vsel %vm48, %v49, %v26
    %v51 = vshrl.u32 %v50, 4
    %v52 = vand.u32 %v50, 15
    %v53 = vsub.s32 0, %v52
    %v54 = vsel %vm48, %v53, %v52
    %vm55 = vcmp.ne.s32.totalorder %v33, 0
    %vm56 = vcmp.ne.s32.totalorder %v40, 0
    %vm57 = vcmp.ne.s32.totalorder %v47, 0
    %vm58 = vcmp.ne.s32.totalorder %v54, 0
    %vm59 = vcmp.lt.s32.totalorder %v33, 0
    %vm60 = vcmp.lt.s32.totalorder %v40, 0
    %vm61 = vcmp.lt.s32.totalorder %v47, 0
    %vm62 = vcmp.lt.s32.totalorder %v54, 0
    %vm63 = vmand %vm59, %vm55
    %vm64 = vmand %vm60, %vm56
    %vm65 = vmand %vm61, %vm57
    %vm66 = vmand %vm62, %vm58
    %v67 = vadd.s32 %v33, 16
    %v68 = vadd.s32 %v40, 16
    %v69 = vadd.s32 %v47, 16
    %v70 = vadd.s32 %v54, 16
    %v71 = vsel %vm63, %v67, %v33
    %v72 = vsel %vm64, %v68, %v40
    %v73 = vsel %vm65, %v69, %v47
    %v74 = vsel %vm66, %v70, %v54
    %vm75 = vcmp.gt.s32.totalorder %v71, 0
    %vm76 = vcmp.gt.s32.totalorder %v72, 0
    %vm77 = vcmp.gt.s32.totalorder %v73, 0
    %vm78 = vcmp.gt.s32.totalorder %v74, 0
    %v79 = vsel %vm75, 1, 0
    %v80 = vsel %vm76, 1, 0
    %v81 = vsel %vm77, 1, 0
    %v82 = vsel %vm78, 1, 0
    %v83 = vcvt.s32.f32 %v79
    %v84 = vcvt.s32.f32 %v80
    %v85 = vcvt.s32.f32 %v81
    %v86 = vcvt.s32.f32 %v82
    %vm87 = vcmp.lt.s32.totalorder %v71, 15
    %vm88 = vcmp.lt.s32.totalorder %v72, 15
    %vm89 = vcmp.lt.s32.totalorder %v73, 15
    %vm90 = vcmp.lt.s32.totalorder %v74, 15
    %v91 = vsel %vm87, 1, 0
    %v92 = vsel %vm88, 1, 0
    %v93 = vsel %vm89, 1, 0
    %v94 = vsel %vm90, 1, 0
    %v95 = vcvt.s32.f32 %v91
    %v96 = vcvt.s32.f32 %v92
    %v97 = vcvt.s32.f32 %v93
    %v98 = vcvt.s32.f32 %v94
    %v99 = vld [vmem:[%s2] sm:$0xf]
    %v100 = vld [vmem:[%s1] sm:$0xf]
    %v101 = vld [vmem:[%s1 + $0x4] sm:$0xf]
    %v102 = vld [vmem:[%s1 + $0x8] sm:$0xf]
    %v103 = vld [vmem:[%s1 + $0xc] sm:$0xf]
    %v104 = vld [vmem:[%s1 + $0x10] sm:$0xf]
    %v105 = vld [vmem:[%s1 + $0x14] sm:$0xf]
    %v106 = vld [vmem:[%s1 + $0x18] sm:$0xf]
    %v107 = vld [vmem:[%s1 + $0x1c] sm:$0xf]
    %v108 = vld [vmem:[%s1 + $0x20] sm:$0xf]
    %v109 = vld [vmem:[%s1 + $0x24] sm:$0xf]
    %v110 = vld [vmem:[%s1 + $0x28] sm:$0xf]
    %v111 = vld [vmem:[%s1 + $0x2c] sm:$0xf]
    %v112 = vld [vmem:[%s1 + $0x30] sm:$0xf]
    %v113 = vld [vmem:[%s1 + $0x34] sm:$0xf]
    %v114 = vld [vmem:[%s1 + $0x38] sm:$0xf]
    %v115 = vld [vmem:[%s1 + $0x3c] sm:$0xf]
    %v116 = vld [vmem:[%s1 + $0x40] sm:$0xf]
    %v117 = vld [vmem:[%s1 + $0x44] sm:$0xf]
    %v118 = vld [vmem:[%s1 + $0x48] sm:$0xf]
    %v119 = vld [vmem:[%s1 + $0x4c] sm:$0xf]
    %v120 = vld [vmem:[%s1 + $0x50] sm:$0xf]
    %v121 = vld [vmem:[%s1 + $0x54] sm:$0xf]
    %v122 = vld [vmem:[%s1 + $0x58] sm:$0xf]
    %v123 = vld [vmem:[%s1 + $0x5c] sm:$0xf]
    %v124 = vld [vmem:[%s1 + $0x60] sm:$0xf]
    %v125 = vld [vmem:[%s1 + $0x64] sm:$0xf]
    %v126 = vld [vmem:[%s1 + $0x68] sm:$0xf]
    %v127 = vld [vmem:[%s1 + $0x6c] sm:$0xf]
    %v128 = vld [vmem:[%s1 + $0x70] sm:$0xf]
    %v129 = vld [vmem:[%s1 + $0x74] sm:$0xf]
    %v130 = vld [vmem:[%s1 + $0x78] sm:$0xf]
    %v131 = vld [vmem:[%s1 + $0x7c] sm:$0xf]
    %v132 = vld [vmem:[%s1 + $0x80] sm:$0xf]
    %v133 = vld [vmem:[%s1 + $0x84] sm:$0xf]
    %v134 = vld [vmem:[%s1 + $0x88] sm:$0xf]
    %v135 = vld [vmem:[%s1 + $0x8c] sm:$0xf]
    %v136 = vld [vmem:[%s1 + $0x90] sm:$0xf]
    %v137 = vld [vmem:[%s1 + $0x94] sm:$0xf]
    %v138 = vld [vmem:[%s1 + $0x98] sm:$0xf]
    %v139 = vld [vmem:[%s1 + $0x9c] sm:$0xf]
    %v140 = vld [vmem:[%s1 + $0xa0] sm:$0xf]
    %v141 = vld [vmem:[%s1 + $0xa4] sm:$0xf]
    %v142 = vld [vmem:[%s1 + $0xa8] sm:$0xf]
    %v143 = vld [vmem:[%s1 + $0xac] sm:$0xf]
    %v144 = vld [vmem:[%s1 + $0xb0] sm:$0xf]
    %v145 = vld [vmem:[%s1 + $0xb4] sm:$0xf]
    %v146 = vld [vmem:[%s1 + $0xb8] sm:$0xf]
    %v147 = vld [vmem:[%s1 + $0xbc] sm:$0xf]
    %s148 = scalar_lea.vmem %s1, 192
    %v149 = vld [vmem:[%s148] sm:$0xf]
    %v150 = vld [vmem:[%s148 + $0x4] sm:$0xf]
    %v151 = vld [vmem:[%s148 + $0x8] sm:$0xf]
    %v152 = vld [vmem:[%s148 + $0xc] sm:$0xf]
    %v153 = vld [vmem:[%s148 + $0x10] sm:$0xf]
    %v154 = vld [vmem:[%s148 + $0x14] sm:$0xf]
    %v155 = vld [vmem:[%s148 + $0x18] sm:$0xf]
    %v156 = vld [vmem:[%s148 + $0x1c] sm:$0xf]
    %v157 = vld [vmem:[%s148 + $0x20] sm:$0xf]
    %v158 = vld [vmem:[%s148 + $0x24] sm:$0xf]
    %v159 = vld [vmem:[%s148 + $0x28] sm:$0xf]
    %v160 = vld [vmem:[%s148 + $0x2c] sm:$0xf]
    %v161 = vld [vmem:[%s148 + $0x30] sm:$0xf]
    %v162 = vld [vmem:[%s148 + $0x34] sm:$0xf]
    %v163 = vld [vmem:[%s148 + $0x38] sm:$0xf]
    %v164 = vld [vmem:[%s148 + $0x3c] sm:$0xf]
    %v165 = vld [vmem:[%s148 + $0x40] sm:$0xf]
    %v166 = vld [vmem:[%s148 + $0x44] sm:$0xf]
    %v167 = vld [vmem:[%s148 + $0x48] sm:$0xf]
    %v168 = vld [vmem:[%s148 + $0x4c] sm:$0xf]
    %v169 = vld [vmem:[%s148 + $0x50] sm:$0xf]
    %v170 = vld [vmem:[%s148 + $0x54] sm:$0xf]
    %v171 = vld [vmem:[%s148 + $0x58] sm:$0xf]
    %v172 = vld [vmem:[%s148 + $0x5c] sm:$0xf]
    %v173 = vld [vmem:[%s148 + $0x60] sm:$0xf]
    %v174 = vld [vmem:[%s148 + $0x64] sm:$0xf]
    %v175 = vld [vmem:[%s148 + $0x68] sm:$0xf]
    %v176 = vld [vmem:[%s148 + $0x6c] sm:$0xf]
    %v177 = vld [vmem:[%s148 + $0x70] sm:$0xf]
    %v178 = vld [vmem:[%s148 + $0x74] sm:$0xf]
    %v179 = vld [vmem:[%s148 + $0x78] sm:$0xf]
    %v180 = vld [vmem:[%s148 + $0x7c] sm:$0xf]
    %v181 = vld [vmem:[%s148 + $0x80] sm:$0xf]
    %v182 = vld [vmem:[%s148 + $0x84] sm:$0xf]
    %v183 = vld [vmem:[%s148 + $0x88] sm:$0xf]
    %v184 = vld [vmem:[%s148 + $0x8c] sm:$0xf]
    %v185 = vld [vmem:[%s148 + $0x90] sm:$0xf]
    %v186 = vld [vmem:[%s148 + $0x94] sm:$0xf]
    %v187 = vld [vmem:[%s148 + $0x98] sm:$0xf]
    %v188 = vld [vmem:[%s148 + $0x9c] sm:$0xf]
    %v189 = vld [vmem:[%s148 + $0xa0] sm:$0xf]
    %v190 = vld [vmem:[%s148 + $0xa4] sm:$0xf]
    %v191 = vld [vmem:[%s148 + $0xa8] sm:$0xf]
    %v192 = vld [vmem:[%s148 + $0xac] sm:$0xf]
    %v193 = vld [vmem:[%s148 + $0xb0] sm:$0xf]
    %v194 = vld [vmem:[%s148 + $0xb4] sm:$0xf]
    %v195 = vld [vmem:[%s148 + $0xb8] sm:$0xf]
    %v196 = vld [vmem:[%s148 + $0xbc] sm:$0xf]
    %v197 = vld [vmem:[%s0] sm:$0xff]
    %v198 = vld [vmem:[%s0 + $0x8] sm:$0xff]
    %v199 = vld [vmem:[%s0 + $0x10] sm:$0xff]
    %v200 = vld [vmem:[%s0 + $0x18] sm:$0xff]
    %v201 = vrot.slane %v197, 7
    %v202 = vrot.slane %v198, 7
    %v203 = vrot.slane %v199, 7
    %v204 = vrot.slane %v200, 7
    %vm205 = vcmp.lt.s32.totalorder %v23, 1
    %v206 = vsel %vm205, %v203, %v204
    %v207 = vsel %vm205, %v202, %v203
    %v208 = vsel %vm205, %v201, %v202
    %v209 = vsel %vm205, %v204, %v201
    %v210 = vmul.f32 %v209, %v83
    %v211 = vmul.f32 %v208, %v84
    %v212 = vmul.f32 %v207, %v85
    %v213 = vmul.f32 %v206, %v86
    %v214 = vrot.slane %v197, 1
    %v215 = vrot.slane %v198, 1
    %v216 = vrot.slane %v199, 1
    %v217 = vrot.slane %v200, 1
    %vm218 = vcmp.lt.s32.totalorder %v23, 7
    %v219 = vsel %vm218, %v216, %v217
    %v220 = vsel %vm218, %v215, %v216
    %v221 = vsel %vm218, %v214, %v215
    %v222 = vsel %vm218, %v217, %v214
    %v223 = vmul.f32 %v221, %v95
    %v224 = vmul.f32 %v220, %v96
    %v225 = vmul.f32 %v219, %v97
    %v226 = vmul.f32 %v222, %v98
    %v227 = vpack.c.bf16 %v211, %v210
    %v228 = vpack.c.bf16 %v198, %v197
    %v229 = vpack.c.bf16 %v224, %v223
    %v230 = vpack.c.bf16 %v213, %v212
    %v231 = vpack.c.bf16 %v200, %v199
    %v232 = vpack.c.bf16 %v226, %v225
    %v281 = vunpack.c.l.b16 %v100
    %v282 = vunpack.c.l.b16 %v101
    %v283 = vunpack.c.l.b16 %v102
    %v284 = vunpack.c.l.b16 %v103
    %v285 = vunpack.c.l.b16 %v104
    %v286 = vunpack.c.l.b16 %v105
    %v287 = vunpack.c.l.b16 %v106
    %v288 = vunpack.c.l.b16 %v107
    %v289 = vunpack.c.l.b16 %v108
    %v290 = vunpack.c.l.b16 %v109
    %v291 = vunpack.c.l.b16 %v110
    %v292 = vunpack.c.l.b16 %v111
    %v293 = vunpack.c.l.b16 %v112
    %v294 = vunpack.c.l.b16 %v113
    %v295 = vunpack.c.l.b16 %v114
    %v296 = vunpack.c.l.b16 %v115
    %v297 = vunpack.c.l.b16 %v116
    %v298 = vunpack.c.l.b16 %v117
    %v299 = vunpack.c.l.b16 %v118
    %v300 = vunpack.c.l.b16 %v119
    %v301 = vunpack.c.l.b16 %v120
    %v302 = vunpack.c.l.b16 %v121
    %v303 = vunpack.c.l.b16 %v122
    %v304 = vunpack.c.l.b16 %v123
    %v305 = vunpack.c.l.b16 %v124
    %v306 = vunpack.c.l.b16 %v125
    %v307 = vunpack.c.l.b16 %v126
    %v308 = vunpack.c.l.b16 %v127
    %v309 = vunpack.c.l.b16 %v128
    %v310 = vunpack.c.l.b16 %v129
    %v311 = vunpack.c.l.b16 %v130
    %v312 = vunpack.c.l.b16 %v131
    %v313 = vunpack.c.l.b16 %v132
    %v314 = vunpack.c.l.b16 %v133
    %v315 = vunpack.c.l.b16 %v134
    %v316 = vunpack.c.l.b16 %v135
    %v317 = vunpack.c.l.b16 %v136
    %v318 = vunpack.c.l.b16 %v137
    %v319 = vunpack.c.l.b16 %v138
    %v320 = vunpack.c.l.b16 %v139
    %v321 = vunpack.c.l.b16 %v140
    %v322 = vunpack.c.l.b16 %v141
    %v323 = vunpack.c.l.b16 %v142
    %v324 = vunpack.c.l.b16 %v143
    %v325 = vunpack.c.l.b16 %v144
    %v326 = vunpack.c.l.b16 %v145
    %v327 = vunpack.c.l.b16 %v146
    %v328 = vunpack.c.l.b16 %v147
    %v329 = vpack.c.b16 %v282, %v281
    %v330 = vpack.c.b16 %v284, %v283
    %v331 = vpack.c.b16 %v286, %v285
    %v332 = vpack.c.b16 %v288, %v287
    %v333 = vpack.c.b16 %v290, %v289
    %v334 = vpack.c.b16 %v292, %v291
    %v335 = vpack.c.b16 %v294, %v293
    %v336 = vpack.c.b16 %v296, %v295
    %v337 = vpack.c.b16 %v298, %v297
    %v338 = vpack.c.b16 %v300, %v299
    %v339 = vpack.c.b16 %v302, %v301
    %v340 = vpack.c.b16 %v304, %v303
    %v341 = vpack.c.b16 %v306, %v305
    %v342 = vpack.c.b16 %v308, %v307
    %v343 = vpack.c.b16 %v310, %v309
    %v344 = vpack.c.b16 %v312, %v311
    %v345 = vpack.c.b16 %v314, %v313
    %v346 = vpack.c.b16 %v316, %v315
    %v347 = vpack.c.b16 %v318, %v317
    %v348 = vpack.c.b16 %v320, %v319
    %v349 = vpack.c.b16 %v322, %v321
    %v350 = vpack.c.b16 %v324, %v323
    %v351 = vpack.c.b16 %v326, %v325
    %v352 = vpack.c.b16 %v328, %v327
    %377 = vmatprep.subr.bf16.mxu0 0
    %378 = vmatpush1.bf16.msra.mxu0 %v329
    %379 = vmatprep.subr.bf16.mxu0 0
    %380 = vmatpush1.bf16.msra.mxu0 %v330
    %381 = vmatprep.subr.bf16.mxu0 0
    %382 = vmatpush1.bf16.msra.mxu0 %v331
    %383 = vmatprep.subr.bf16.mxu0 0
    %384 = vmatpush1.bf16.msra.mxu0 %v332
    %385 = vmatprep.subr.bf16.mxu0 0
    %386 = vmatpush1.bf16.msra.mxu0 %v333
    %387 = vmatprep.subr.bf16.mxu0 0
    %388 = vmatpush1.bf16.msra.mxu0 %v334
    %389 = vmatprep.subr.bf16.mxu0 0
    %390 = vmatpush1.bf16.msra.mxu0 %v335
    %391 = vmatprep.subr.bf16.mxu0 0
    %392 = vmatpush1.bf16.msra.mxu0 %v336
    %393 = vmatprep.subr.bf16.mxu0 0
    %394 = vmatpush1.bf16.msra.mxu0 %v337
    %395 = vmatprep.subr.bf16.mxu0 0
    %396 = vmatpush1.bf16.msra.mxu0 %v338
    %397 = vmatprep.subr.bf16.mxu0 0
    %398 = vmatpush1.bf16.msra.mxu0 %v339
    %399 = vmatprep.subr.bf16.mxu0 0
    %400 = vmatpush1.bf16.msra.mxu0 %v340
    %401 = vmatprep.subr.bf16.mxu0 0
    %402 = vmatpush1.bf16.msra.mxu0 %v341
    %403 = vmatprep.subr.bf16.mxu0 0
    %404 = vmatpush1.bf16.msra.mxu0 %v342
    %405 = vmatprep.subr.bf16.mxu0 0
    %406 = vmatpush1.bf16.msra.mxu0 %v343
    %407 = vmatprep.subr.bf16.mxu0 0
    %408 = vmatpush1.bf16.msra.mxu0 %v344
    %409 = vmatprep.mubr.bf16.mxu0 %v228
    %410 = vmatmul.mubr.bf16.gmra.mrb[0].mxu0 %v227
    %v411 = vpop.f32.mrb[0].mxu0
    %v412 = vadd.f32 0.0, %v411
    %v413 = vpop.f32.mrb[0].mxu0
    %v414 = vpop.f32.mrb[0].mxu0
    %v415 = vadd.f32 0.0, %v414
    %v416 = vpop.f32.mrb[0].mxu0
    %417 = vmatprep.mubr.bf16.mxu0 %v231
    %418 = vmatmul.mubr.bf16.gmra.mrb[0].mxu0 %v230
    %v419 = vpop.f32.mrb[0].mxu0
    %v420 = vadd.f32 0.0, %v419
    %v421 = vpop.f32.mrb[0].mxu0
    %v422 = vpop.f32.mrb[0].mxu0
    %v423 = vadd.f32 0.0, %v422
    %v424 = vpop.f32.mrb[0].mxu0
    %425 = vdwg.mxu0
    %426 = vmatprep.subr.bf16.mxu0 0
    %427 = vmatpush1.bf16.msra.mxu0 %v345
    %428 = vmatprep.subr.bf16.mxu0 0
    %429 = vmatpush1.bf16.msra.mxu0 %v346
    %430 = vmatprep.subr.bf16.mxu0 0
    %431 = vmatpush1.bf16.msra.mxu0 %v347
    %432 = vmatprep.subr.bf16.mxu0 0
    %433 = vmatpush1.bf16.msra.mxu0 %v348
    %434 = vmatprep.subr.bf16.mxu0 0
    %435 = vmatpush1.bf16.msra.mxu0 %v349
    %436 = vmatprep.subr.bf16.mxu0 0
    %437 = vmatpush1.bf16.msra.mxu0 %v350
    %438 = vmatprep.subr.bf16.mxu0 0
    %439 = vmatpush1.bf16.msra.mxu0 %v351
    %440 = vmatprep.subr.bf16.mxu0 0
    %441 = vmatpush1.bf16.msra.mxu0 %v352
    %442 = vmatprep.subr.bf16.mxu0 0
    %443 = vmatpush1.bf16.msra.mxu0 0
    %444 = vmatprep.subr.bf16.mxu0 0
    %445 = vmatpush1.bf16.msra.mxu0 0
    %446 = vmatprep.subr.bf16.mxu0 0
    %447 = vmatpush1.bf16.msra.mxu0 0
    %448 = vmatprep.subr.bf16.mxu0 0
    %449 = vmatpush1.bf16.msra.mxu0 0
    %450 = vmatprep.subr.bf16.mxu0 0
    %451 = vmatpush1.bf16.msra.mxu0 0
    %452 = vmatprep.subr.bf16.mxu0 0
    %453 = vmatpush1.bf16.msra.mxu0 0
    %454 = vmatprep.subr.bf16.mxu0 0
    %455 = vmatpush1.bf16.msra.mxu0 0
    %456 = vmatprep.subr.bf16.mxu0 0
    %457 = vmatpush1.bf16.msra.mxu0 0
    %458 = vmatprep.mubr.bf16.mxu0 0
    %459 = vmatmul.mubr.bf16.gmra.mrb[0].mxu0 %v229
    %v460 = vpop.f32.mrb[0].mxu0
    %v461 = vadd.f32 %v412, %v460
    %v462 = vpop.f32.mrb[0].mxu0
    %v463 = vpop.f32.mrb[0].mxu0
    %v464 = vadd.f32 %v415, %v463
    %v465 = vpop.f32.mrb[0].mxu0
    %466 = vmatprep.mubr.bf16.mxu0 0
    %467 = vmatmul.mubr.bf16.gmra.mrb[0].mxu0 %v232
    %v468 = vpop.f32.mrb[0].mxu0
    %v469 = vadd.f32 %v420, %v468
    %v470 = vpop.f32.mrb[0].mxu0
    %v471 = vpop.f32.mrb[0].mxu0
    %v472 = vadd.f32 %v423, %v471
    %v473 = vpop.f32.mrb[0].mxu0
    %474 = vdwg.mxu0
    %v475 = vadd.f32 %v461, %v464
    %v476 = vadd.f32 %v475, %v469
    %v477 = vadd.f32 %v476, %v472
    %v478 = vrot.slane %v477, 4
    %v479 = vadd.f32 %v477, %v478
    %v480 = vrot.slane %v479, 2
    %v481 = vadd.f32 %v479, %v480
    %v482 = vrot.slane %v481, 1
    %v483 = vadd.f32 %v481, %v482
    %v484 = vmul.f32 %v461, %v461
    %v485 = vmul.f32 %v464, %v464
    %v486 = vmul.f32 %v469, %v469
    %v487 = vmul.f32 %v472, %v472
    %v488 = vadd.f32 %v484, %v485
    %v489 = vadd.f32 %v488, %v486
    %v490 = vadd.f32 %v489, %v487
    %v491 = vrot.slane %v490, 4
    %v492 = vadd.f32 %v490, %v491
    %v493 = vrot.slane %v492, 2
    %v494 = vadd.f32 %v492, %v493
    %v495 = vrot.slane %v494, 1
    %v496 = vadd.f32 %v494, %v495
    %vm497 = vcmask 1040384
    %v498 = vsel %vm497, %v483, %v496
    %499 = vrot.lane.b32.xlu0 %v498, 8
    %v500 = vpop.permute.xlu0 %499
    %v501 = vadd.f32 %v498, %v500
    %502 = vrot.lane.b32.xlu0 %v501, 16
    %v503 = vpop.permute.xlu0 %502
    %v504 = vadd.f32 %v501, %v503
    %505 = vrot.lane.b32.xlu0 %v504, 32
    %v506 = vpop.permute.xlu0 %505
    %v507 = vadd.f32 %v504, %v506
    %508 = vrot.lane.b32.xlu0 %v507, 64
    %v509 = vpop.permute.xlu0 %508
    %v510 = vadd.f32 %v507, %v509
    %v511 = vmul.f32 %v510, 0.001953125
    %v512 = vmul.f32 %v511, %v511
    %v514 = vrot.slane %v512, 7
    %v516 = vsub.f32 %v511, %v514
    %v517 = vmax.f32 %v516, 0.0
    %v518 = vadd.f32 %v517, 1e-05
    %v519 = vrsqrt.pop %v518
    %v521 = vrot.slane %v519, 1
    %v523 = vmul.f32 %v99, %v521
    %v524 = vmul.f32 %v511, %v523
    %v526 = vrot.slane %v524, 7
    %v528 = vsub.f32 %v99, %v526
    %v529 = vlaneseq
    %v530 = vshrl.u32 %v529, 7
    %v531 = vsub.s32 0, %v530
    %v532 = vrot.slane %v523, %v531
    %v533 = vmul.f32 %v461, %v532
    %v534 = vmul.f32 %v464, %v532
    %v535 = vmul.f32 %v469, %v532
    %v536 = vmul.f32 %v472, %v532
    %v537 = vlaneseq
    %v538 = vshrl.u32 %v537, 7
    %v539 = vsub.s32 1, %v538
    %v540 = vrot.slane %v528, %v539
    %v541 = vadd.f32 %v533, %v540
    %v542 = vadd.f32 %v534, %v540
    %v543 = vadd.f32 %v535, %v540
    %v544 = vadd.f32 %v536, %v540
    %v545 = vtanh.pop %v541
    %v546 = vtanh.pop %v542
    %v547 = vtanh.pop %v543
    %v548 = vtanh.pop %v544
    %v549 = vrot.slane %v545, 7
    %v550 = vrot.slane %v546, 7
    %v551 = vrot.slane %v547, 7
    %v552 = vrot.slane %v548, 7
    %v553 = vsel %vm205, %v551, %v552
    %v554 = vsel %vm205, %v550, %v551
    %v555 = vsel %vm205, %v549, %v550
    %v556 = vsel %vm205, %v552, %v549
    %v557 = vmul.f32 %v556, %v83
    %v558 = vmul.f32 %v555, %v84
    %v559 = vmul.f32 %v554, %v85
    %v560 = vmul.f32 %v553, %v86
    %v561 = vrot.slane %v545, 1
    %v562 = vrot.slane %v546, 1
    %v563 = vrot.slane %v547, 1
    %v564 = vrot.slane %v548, 1
    %v565 = vsel %vm218, %v563, %v564
    %v566 = vsel %vm218, %v562, %v563
    %v567 = vsel %vm218, %v561, %v562
    %v568 = vsel %vm218, %v564, %v561
    %v569 = vmul.f32 %v567, %v95
    %v570 = vmul.f32 %v566, %v96
    %v571 = vmul.f32 %v565, %v97
    %v572 = vmul.f32 %v568, %v98
    %v573 = vpack.c.bf16 %v558, %v557
    %v574 = vpack.c.bf16 %v546, %v545
    %v575 = vpack.c.bf16 %v570, %v569
    %v576 = vpack.c.bf16 %v560, %v559
    %v577 = vpack.c.bf16 %v548, %v547
    %v578 = vpack.c.bf16 %v572, %v571
    %v627 = vunpack.c.l.b16 %v149
    %v628 = vunpack.c.l.b16 %v150
    %v629 = vunpack.c.l.b16 %v151
    %v630 = vunpack.c.l.b16 %v152
    %v631 = vunpack.c.l.b16 %v153
    %v632 = vunpack.c.l.b16 %v154
    %v633 = vunpack.c.l.b16 %v155
    %v634 = vunpack.c.l.b16 %v156
    %v635 = vunpack.c.l.b16 %v157
    %v636 = vunpack.c.l.b16 %v158
    %v637 = vunpack.c.l.b16 %v159
    %v638 = vunpack.c.l.b16 %v160
    %v639 = vunpack.c.l.b16 %v161
    %v640 = vunpack.c.l.b16 %v162
    %v641 = vunpack.c.l.b16 %v163
    %v642 = vunpack.c.l.b16 %v164
    %v643 = vunpack.c.l.b16 %v165
    %v644 = vunpack.c.l.b16 %v166
    %v645 = vunpack.c.l.b16 %v167
    %v646 = vunpack.c.l.b16 %v168
    %v647 = vunpack.c.l.b16 %v169
    %v648 = vunpack.c.l.b16 %v170
    %v649 = vunpack.c.l.b16 %v171
    %v650 = vunpack.c.l.b16 %v172
    %v651 = vunpack.c.l.b16 %v173
    %v652 = vunpack.c.l.b16 %v174
    %v653 = vunpack.c.l.b16 %v175
    %v654 = vunpack.c.l.b16 %v176
    %v655 = vunpack.c.l.b16 %v177
    %v656 = vunpack.c.l.b16 %v178
    %v657 = vunpack.c.l.b16 %v179
    %v658 = vunpack.c.l.b16 %v180
    %v659 = vunpack.c.l.b16 %v181
    %v660 = vunpack.c.l.b16 %v182
    %v661 = vunpack.c.l.b16 %v183
    %v662 = vunpack.c.l.b16 %v184
    %v663 = vunpack.c.l.b16 %v185
    %v664 = vunpack.c.l.b16 %v186
    %v665 = vunpack.c.l.b16 %v187
    %v666 = vunpack.c.l.b16 %v188
    %v667 = vunpack.c.l.b16 %v189
    %v668 = vunpack.c.l.b16 %v190
    %v669 = vunpack.c.l.b16 %v191
    %v670 = vunpack.c.l.b16 %v192
    %v671 = vunpack.c.l.b16 %v193
    %v672 = vunpack.c.l.b16 %v194
    %v673 = vunpack.c.l.b16 %v195
    %v674 = vunpack.c.l.b16 %v196
    %v675 = vpack.c.b16 %v628, %v627
    %v676 = vpack.c.b16 %v630, %v629
    %v677 = vpack.c.b16 %v632, %v631
    %v678 = vpack.c.b16 %v634, %v633
    %v679 = vpack.c.b16 %v636, %v635
    %v680 = vpack.c.b16 %v638, %v637
    %v681 = vpack.c.b16 %v640, %v639
    %v682 = vpack.c.b16 %v642, %v641
    %v683 = vpack.c.b16 %v644, %v643
    %v684 = vpack.c.b16 %v646, %v645
    %v685 = vpack.c.b16 %v648, %v647
    %v686 = vpack.c.b16 %v650, %v649
    %v687 = vpack.c.b16 %v652, %v651
    %v688 = vpack.c.b16 %v654, %v653
    %v689 = vpack.c.b16 %v656, %v655
    %v690 = vpack.c.b16 %v658, %v657
    %v691 = vpack.c.b16 %v660, %v659
    %v692 = vpack.c.b16 %v662, %v661
    %v693 = vpack.c.b16 %v664, %v663
    %v694 = vpack.c.b16 %v666, %v665
    %v695 = vpack.c.b16 %v668, %v667
    %v696 = vpack.c.b16 %v670, %v669
    %v697 = vpack.c.b16 %v672, %v671
    %v698 = vpack.c.b16 %v674, %v673
    %723 = vmatprep.subr.bf16.mxu0 0
    %724 = vmatpush1.bf16.msra.mxu0 %v675
    %725 = vmatprep.subr.bf16.mxu0 0
    %726 = vmatpush1.bf16.msra.mxu0 %v676
    %727 = vmatprep.subr.bf16.mxu0 0
    %728 = vmatpush1.bf16.msra.mxu0 %v677
    %729 = vmatprep.subr.bf16.mxu0 0
    %730 = vmatpush1.bf16.msra.mxu0 %v678
    %731 = vmatprep.subr.bf16.mxu0 0
    %732 = vmatpush1.bf16.msra.mxu0 %v679
    %733 = vmatprep.subr.bf16.mxu0 0
    %734 = vmatpush1.bf16.msra.mxu0 %v680
    %735 = vmatprep.subr.bf16.mxu0 0
    %736 = vmatpush1.bf16.msra.mxu0 %v681
    %737 = vmatprep.subr.bf16.mxu0 0
    %738 = vmatpush1.bf16.msra.mxu0 %v682
    %739 = vmatprep.subr.bf16.mxu0 0
    %740 = vmatpush1.bf16.msra.mxu0 %v683
    %741 = vmatprep.subr.bf16.mxu0 0
    %742 = vmatpush1.bf16.msra.mxu0 %v684
    %743 = vmatprep.subr.bf16.mxu0 0
    %744 = vmatpush1.bf16.msra.mxu0 %v685
    %745 = vmatprep.subr.bf16.mxu0 0
    %746 = vmatpush1.bf16.msra.mxu0 %v686
    %747 = vmatprep.subr.bf16.mxu0 0
    %748 = vmatpush1.bf16.msra.mxu0 %v687
    %749 = vmatprep.subr.bf16.mxu0 0
    %750 = vmatpush1.bf16.msra.mxu0 %v688
    %751 = vmatprep.subr.bf16.mxu0 0
    %752 = vmatpush1.bf16.msra.mxu0 %v689
    %753 = vmatprep.subr.bf16.mxu0 0
    %754 = vmatpush1.bf16.msra.mxu0 %v690
    %755 = vmatprep.mubr.bf16.mxu0 %v574
    %756 = vmatmul.mubr.bf16.gmra.mrb[0].mxu0 %v573
    %v757 = vpop.f32.mrb[0].mxu0
    %v758 = vadd.f32 0.0, %v757
    %v759 = vpop.f32.mrb[0].mxu0
    %v760 = vpop.f32.mrb[0].mxu0
    %v761 = vadd.f32 0.0, %v760
    %v762 = vpop.f32.mrb[0].mxu0
    %763 = vmatprep.mubr.bf16.mxu0 %v577
    %764 = vmatmul.mubr.bf16.gmra.mrb[0].mxu0 %v576
    %v765 = vpop.f32.mrb[0].mxu0
    %v766 = vadd.f32 0.0, %v765
    %v767 = vpop.f32.mrb[0].mxu0
    %v768 = vpop.f32.mrb[0].mxu0
    %v769 = vadd.f32 0.0, %v768
    %v770 = vpop.f32.mrb[0].mxu0
    %771 = vdwg.mxu0
    %772 = vmatprep.subr.bf16.mxu0 0
    %773 = vmatpush1.bf16.msra.mxu0 %v691
    %774 = vmatprep.subr.bf16.mxu0 0
    %775 = vmatpush1.bf16.msra.mxu0 %v692
    %776 = vmatprep.subr.bf16.mxu0 0
    %777 = vmatpush1.bf16.msra.mxu0 %v693
    %778 = vmatprep.subr.bf16.mxu0 0
    %779 = vmatpush1.bf16.msra.mxu0 %v694
    %780 = vmatprep.subr.bf16.mxu0 0
    %781 = vmatpush1.bf16.msra.mxu0 %v695
    %782 = vmatprep.subr.bf16.mxu0 0
    %783 = vmatpush1.bf16.msra.mxu0 %v696
    %784 = vmatprep.subr.bf16.mxu0 0
    %785 = vmatpush1.bf16.msra.mxu0 %v697
    %786 = vmatprep.subr.bf16.mxu0 0
    %787 = vmatpush1.bf16.msra.mxu0 %v698
    %788 = vmatprep.subr.bf16.mxu0 0
    %789 = vmatpush1.bf16.msra.mxu0 0
    %790 = vmatprep.subr.bf16.mxu0 0
    %791 = vmatpush1.bf16.msra.mxu0 0
    %792 = vmatprep.subr.bf16.mxu0 0
    %793 = vmatpush1.bf16.msra.mxu0 0
    %794 = vmatprep.subr.bf16.mxu0 0
    %795 = vmatpush1.bf16.msra.mxu0 0
    %796 = vmatprep.subr.bf16.mxu0 0
    %797 = vmatpush1.bf16.msra.mxu0 0
    %798 = vmatprep.subr.bf16.mxu0 0
    %799 = vmatpush1.bf16.msra.mxu0 0
    %800 = vmatprep.subr.bf16.mxu0 0
    %801 = vmatpush1.bf16.msra.mxu0 0
    %802 = vmatprep.subr.bf16.mxu0 0
    %803 = vmatpush1.bf16.msra.mxu0 0
    %804 = vmatprep.mubr.bf16.mxu0 0
    %805 = vmatmul.mubr.bf16.gmra.mrb[0].mxu0 %v575
    %v806 = vpop.f32.mrb[0].mxu0
    %v807 = vadd.f32 %v758, %v806
    %v808 = vpop.f32.mrb[0].mxu0
    %v809 = vpop.f32.mrb[0].mxu0
    %v810 = vadd.f32 %v761, %v809
    %v811 = vpop.f32.mrb[0].mxu0
    %812 = vmatprep.mubr.bf16.mxu0 0
    %813 = vmatmul.mubr.bf16.gmra.mrb[0].mxu0 %v578
    %v814 = vpop.f32.mrb[0].mxu0
    %v815 = vadd.f32 %v766, %v814
    %v816 = vpop.f32.mrb[0].mxu0
    %v817 = vpop.f32.mrb[0].mxu0
    %v818 = vadd.f32 %v769, %v817
    %v819 = vpop.f32.mrb[0].mxu0
    %820 = vdwg.mxu0
    %v821 = vadd.f32 %v807, %v810
    %v822 = vadd.f32 %v821, %v815
    %v823 = vadd.f32 %v822, %v818
    %v824 = vrot.slane %v823, 4
    %v825 = vadd.f32 %v823, %v824
    %v826 = vrot.slane %v825, 2
    %v827 = vadd.f32 %v825, %v826
    %v828 = vrot.slane %v827, 1
    %v829 = vadd.f32 %v827, %v828
    %v830 = vmul.f32 %v807, %v807
    %v831 = vmul.f32 %v810, %v810
    %v832 = vmul.f32 %v815, %v815
    %v833 = vmul.f32 %v818, %v818
    %v834 = vadd.f32 %v830, %v831
    %v835 = vadd.f32 %v834, %v832
    %v836 = vadd.f32 %v835, %v833
    %v837 = vrot.slane %v836, 4
    %v838 = vadd.f32 %v836, %v837
    %v839 = vrot.slane %v838, 2
    %v840 = vadd.f32 %v838, %v839
    %v841 = vrot.slane %v840, 1
    %v842 = vadd.f32 %v840, %v841
    %v843 = vsel %vm497, %v829, %v842
    %844 = vrot.lane.b32.xlu0 %v843, 8
    %v845 = vpop.permute.xlu0 %844
    %v846 = vadd.f32 %v843, %v845
    %847 = vrot.lane.b32.xlu0 %v846, 16
    %v848 = vpop.permute.xlu0 %847
    %v849 = vadd.f32 %v846, %v848
    %850 = vrot.lane.b32.xlu0 %v849, 32
    %v851 = vpop.permute.xlu0 %850
    %v852 = vadd.f32 %v849, %v851
    %853 = vrot.lane.b32.xlu0 %v852, 64
    %v854 = vpop.permute.xlu0 %853
    %v855 = vadd.f32 %v852, %v854
    %v856 = vmul.f32 %v855, 0.001953125
    %v857 = vmul.f32 %v856, %v856
    %v859 = vrot.slane %v857, 7
    %v861 = vsub.f32 %v856, %v859
    %v862 = vmax.f32 %v861, 0.0
    %v863 = vadd.f32 %v862, 1e-05
    %v864 = vrsqrt.pop %v863
    %v866 = vrot.slane %v864, 7
    %v868 = vmul.f32 %v99, %v866
    %v870 = vrot.slane %v868, 2
    %v872 = vmul.f32 %v856, %v870
    %v874 = vrot.slane %v872, 5
    %v876 = vsub.f32 %v99, %v874
    %v877 = vlaneseq
    %v878 = vshrl.u32 %v877, 7
    %v879 = vsub.s32 2, %v878
    %v880 = vrot.slane %v868, %v879
    %v881 = vmul.f32 %v807, %v880
    %v882 = vmul.f32 %v810, %v880
    %v883 = vmul.f32 %v815, %v880
    %v884 = vmul.f32 %v818, %v880
    %v885 = vlaneseq
    %v886 = vshrl.u32 %v885, 7
    %v887 = vsub.s32 3, %v886
    %v888 = vrot.slane %v876, %v887
    %v889 = vadd.f32 %v881, %v888
    %v890 = vadd.f32 %v882, %v888
    %v891 = vadd.f32 %v883, %v888
    %v892 = vadd.f32 %v884, %v888
    %v893 = vtanh.pop %v889
    %v894 = vtanh.pop %v890
    %v895 = vtanh.pop %v891
    %v896 = vtanh.pop %v892
    %v897 = vrot.slane %v893, 7
    %v898 = vrot.slane %v894, 7
    %v899 = vrot.slane %v895, 7
    %v900 = vrot.slane %v896, 7
    %v901 = vsel %vm205, %v899, %v900
    %v902 = vsel %vm205, %v898, %v899
    %v903 = vsel %vm205, %v897, %v898
    %v904 = vsel %vm205, %v900, %v897
    %v905 = vmul.f32 %v904, %v83
    %v906 = vmul.f32 %v903, %v84
    %v907 = vmul.f32 %v902, %v85
    %v908 = vmul.f32 %v901, %v86
    %v909 = vrot.slane %v893, 1
    %v910 = vrot.slane %v894, 1
    %v911 = vrot.slane %v895, 1
    %v912 = vrot.slane %v896, 1
    %v913 = vsel %vm218, %v911, %v912
    %v914 = vsel %vm218, %v910, %v911
    %v915 = vsel %vm218, %v909, %v910
    %v916 = vsel %vm218, %v912, %v909
    %v917 = vmul.f32 %v915, %v95
    %v918 = vmul.f32 %v914, %v96
    %v919 = vmul.f32 %v913, %v97
    %v920 = vmul.f32 %v916, %v98
    %v921 = vpack.c.bf16 %v906, %v905
    %v922 = vpack.c.bf16 %v894, %v893
    %v923 = vpack.c.bf16 %v918, %v917
    %v924 = vpack.c.bf16 %v908, %v907
    %v925 = vpack.c.bf16 %v896, %v895
    %v926 = vpack.c.bf16 %v920, %v919
    %927 = vmatprep.subr.bf16.mxu0 0
    %928 = vmatpush1.bf16.msra.mxu0 %v675
    %929 = vmatprep.subr.bf16.mxu0 0
    %930 = vmatpush1.bf16.msra.mxu0 %v676
    %931 = vmatprep.subr.bf16.mxu0 0
    %932 = vmatpush1.bf16.msra.mxu0 %v677
    %933 = vmatprep.subr.bf16.mxu0 0
    %934 = vmatpush1.bf16.msra.mxu0 %v678
    %935 = vmatprep.subr.bf16.mxu0 0
    %936 = vmatpush1.bf16.msra.mxu0 %v679
    %937 = vmatprep.subr.bf16.mxu0 0
    %938 = vmatpush1.bf16.msra.mxu0 %v680
    %939 = vmatprep.subr.bf16.mxu0 0
    %940 = vmatpush1.bf16.msra.mxu0 %v681
    %941 = vmatprep.subr.bf16.mxu0 0
    %942 = vmatpush1.bf16.msra.mxu0 %v682
    %943 = vmatprep.subr.bf16.mxu0 0
    %944 = vmatpush1.bf16.msra.mxu0 %v683
    %945 = vmatprep.subr.bf16.mxu0 0
    %946 = vmatpush1.bf16.msra.mxu0 %v684
    %947 = vmatprep.subr.bf16.mxu0 0
    %948 = vmatpush1.bf16.msra.mxu0 %v685
    %949 = vmatprep.subr.bf16.mxu0 0
    %950 = vmatpush1.bf16.msra.mxu0 %v686
    %951 = vmatprep.subr.bf16.mxu0 0
    %952 = vmatpush1.bf16.msra.mxu0 %v687
    %953 = vmatprep.subr.bf16.mxu0 0
    %954 = vmatpush1.bf16.msra.mxu0 %v688
    %955 = vmatprep.subr.bf16.mxu0 0
    %956 = vmatpush1.bf16.msra.mxu0 %v689
    %957 = vmatprep.subr.bf16.mxu0 0
    %958 = vmatpush1.bf16.msra.mxu0 %v690
    %959 = vmatprep.mubr.bf16.mxu0 %v922
    %960 = vmatmul.mubr.bf16.gmra.mrb[0].mxu0 %v921
    %v961 = vpop.f32.mrb[0].mxu0
    %v962 = vadd.f32 0.0, %v961
    %v963 = vpop.f32.mrb[0].mxu0
    %v964 = vpop.f32.mrb[0].mxu0
    %v965 = vadd.f32 0.0, %v964
    %v966 = vpop.f32.mrb[0].mxu0
    %967 = vmatprep.mubr.bf16.mxu0 %v925
    %968 = vmatmul.mubr.bf16.gmra.mrb[0].mxu0 %v924
    %v969 = vpop.f32.mrb[0].mxu0
    %v970 = vadd.f32 0.0, %v969
    %v971 = vpop.f32.mrb[0].mxu0
    %v972 = vpop.f32.mrb[0].mxu0
    %v973 = vadd.f32 0.0, %v972
    %v974 = vpop.f32.mrb[0].mxu0
    %975 = vdwg.mxu0
    %976 = vmatprep.subr.bf16.mxu0 0
    %977 = vmatpush1.bf16.msra.mxu0 %v691
    %978 = vmatprep.subr.bf16.mxu0 0
    %979 = vmatpush1.bf16.msra.mxu0 %v692
    %980 = vmatprep.subr.bf16.mxu0 0
    %981 = vmatpush1.bf16.msra.mxu0 %v693
    %982 = vmatprep.subr.bf16.mxu0 0
    %983 = vmatpush1.bf16.msra.mxu0 %v694
    %984 = vmatprep.subr.bf16.mxu0 0
    %985 = vmatpush1.bf16.msra.mxu0 %v695
    %986 = vmatprep.subr.bf16.mxu0 0
    %987 = vmatpush1.bf16.msra.mxu0 %v696
    %988 = vmatprep.subr.bf16.mxu0 0
    %989 = vmatpush1.bf16.msra.mxu0 %v697
    %990 = vmatprep.subr.bf16.mxu0 0
    %991 = vmatpush1.bf16.msra.mxu0 %v698
    %992 = vmatprep.subr.bf16.mxu0 0
    %993 = vmatpush1.bf16.msra.mxu0 0
    %994 = vmatprep.subr.bf16.mxu0 0
    %995 = vmatpush1.bf16.msra.mxu0 0
    %996 = vmatprep.subr.bf16.mxu0 0
    %997 = vmatpush1.bf16.msra.mxu0 0
    %998 = vmatprep.subr.bf16.mxu0 0
    %999 = vmatpush1.bf16.msra.mxu0 0
    %1000 = vmatprep.subr.bf16.mxu0 0
    %1001 = vmatpush1.bf16.msra.mxu0 0
    %1002 = vmatprep.subr.bf16.mxu0 0
    %1003 = vmatpush1.bf16.msra.mxu0 0
    %1004 = vmatprep.subr.bf16.mxu0 0
    %1005 = vmatpush1.bf16.msra.mxu0 0
    %1006 = vmatprep.subr.bf16.mxu0 0
    %1007 = vmatpush1.bf16.msra.mxu0 0
    %1008 = vmatprep.mubr.bf16.mxu0 0
    %1009 = vmatmul.mubr.bf16.gmra.mrb[0].mxu0 %v923
    %v1010 = vpop.f32.mrb[0].mxu0
    %v1011 = vadd.f32 %v962, %v1010
    %v1012 = vpop.f32.mrb[0].mxu0
    %v1013 = vpop.f32.mrb[0].mxu0
    %v1014 = vadd.f32 %v965, %v1013
    %v1015 = vpop.f32.mrb[0].mxu0
    %1016 = vmatprep.mubr.bf16.mxu0 0
    %1017 = vmatmul.mubr.bf16.gmra.mrb[0].mxu0 %v926
    %v1018 = vpop.f32.mrb[0].mxu0
    %v1019 = vadd.f32 %v970, %v1018
    %v1020 = vpop.f32.mrb[0].mxu0
    %v1021 = vpop.f32.mrb[0].mxu0
    %v1022 = vadd.f32 %v973, %v1021
    %v1023 = vpop.f32.mrb[0].mxu0
    %1024 = vdwg.mxu0
    %v1025 = vadd.f32 %v1011, %v1014
    %v1026 = vadd.f32 %v1025, %v1019
    %v1027 = vadd.f32 %v1026, %v1022
    %v1028 = vrot.slane %v1027, 4
    %v1029 = vadd.f32 %v1027, %v1028
    %v1030 = vrot.slane %v1029, 2
    %v1031 = vadd.f32 %v1029, %v1030
    %v1032 = vrot.slane %v1031, 1
    %v1033 = vadd.f32 %v1031, %v1032
    %v1034 = vmul.f32 %v1011, %v1011
    %v1035 = vmul.f32 %v1014, %v1014
    %v1036 = vmul.f32 %v1019, %v1019
    %v1037 = vmul.f32 %v1022, %v1022
    %v1038 = vadd.f32 %v1034, %v1035
    %v1039 = vadd.f32 %v1038, %v1036
    %v1040 = vadd.f32 %v1039, %v1037
    %v1041 = vrot.slane %v1040, 4
    %v1042 = vadd.f32 %v1040, %v1041
    %v1043 = vrot.slane %v1042, 2
    %v1044 = vadd.f32 %v1042, %v1043
    %v1045 = vrot.slane %v1044, 1
    %v1046 = vadd.f32 %v1044, %v1045
    %v1047 = vsel %vm497, %v1033, %v1046
    %1048 = vrot.lane.b32.xlu0 %v1047, 8
    %v1049 = vpop.permute.xlu0 %1048
    %v1050 = vadd.f32 %v1047, %v1049
    %1051 = vrot.lane.b32.xlu0 %v1050, 16
    %v1052 = vpop.permute.xlu0 %1051
    %v1053 = vadd.f32 %v1050, %v1052
    %1054 = vrot.lane.b32.xlu0 %v1053, 32
    %v1055 = vpop.permute.xlu0 %1054
    %v1056 = vadd.f32 %v1053, %v1055
    %1057 = vrot.lane.b32.xlu0 %v1056, 64
    %v1058 = vpop.permute.xlu0 %1057
    %v1059 = vadd.f32 %v1056, %v1058
    %v1060 = vmul.f32 %v1059, 0.001953125
    %v1061 = vmul.f32 %v1060, %v1060
    %v1063 = vrot.slane %v1061, 7
    %v1065 = vsub.f32 %v1060, %v1063
    %v1066 = vmax.f32 %v1065, 0.0
    %v1067 = vadd.f32 %v1066, 1e-05
    %v1068 = vrsqrt.pop %v1067
    %v1070 = vrot.slane %v1068, 7
    %v1072 = vmul.f32 %v99, %v1070
    %v1074 = vrot.slane %v1072, 2
    %v1076 = vmul.f32 %v1060, %v1074
    %v1078 = vrot.slane %v1076, 5
    %v1080 = vsub.f32 %v99, %v1078
    %v1081 = vlaneseq
    %v1082 = vshrl.u32 %v1081, 7
    %v1083 = vsub.s32 2, %v1082
    %v1084 = vrot.slane %v1072, %v1083
    %v1085 = vmul.f32 %v1011, %v1084
    %v1086 = vmul.f32 %v1014, %v1084
    %v1087 = vmul.f32 %v1019, %v1084
    %v1088 = vmul.f32 %v1022, %v1084
    %v1089 = vlaneseq
    %v1090 = vshrl.u32 %v1089, 7
    %v1091 = vsub.s32 3, %v1090
    %v1092 = vrot.slane %v1080, %v1091
    %v1093 = vadd.f32 %v1085, %v1092
    %v1094 = vadd.f32 %v1086, %v1092
    %v1095 = vadd.f32 %v1087, %v1092
    %v1096 = vadd.f32 %v1088, %v1092
    %v1097 = vtanh.pop %v1093
    %v1098 = vtanh.pop %v1094
    %v1099 = vtanh.pop %v1095
    %v1100 = vtanh.pop %v1096
    %v1101 = vadd.f32 %v1097, %v1098
    %v1102 = vrot.slane %v1101, 4
    %v1103 = vadd.f32 %v1101, %v1102
    %v1104 = vrot.slane %v1103, 2
    %v1105 = vadd.f32 %v1103, %v1104
    %v1106 = vrot.slane %v1105, 1
    %v1107 = vadd.f32 %v1105, %v1106
    %v1108 = vadd.f32 %v1099, %v1100
    %v1109 = vrot.slane %v1108, 4
    %v1110 = vadd.f32 %v1108, %v1109
    %v1111 = vrot.slane %v1110, 2
    %v1112 = vadd.f32 %v1110, %v1111
    %v1113 = vrot.slane %v1112, 1
    %v1114 = vadd.f32 %v1112, %v1113
    %v1115 = vld [vmem:[%s3] sm:$0xff]
    %v1116 = vld [vmem:[%s3 + $0x8] sm:$0xff]
    %v1117 = vld [vmem:[%s3 + $0x10] sm:$0xff]
    %v1118 = vld [vmem:[%s3 + $0x18] sm:$0xff]
    %v1119 = vld [vmem:[%s3 + $0x20] sm:$0xff]
    %v1120 = vld [vmem:[%s3 + $0x28] sm:$0xff]
    %v1121 = vld [vmem:[%s3 + $0x30] sm:$0xff]
    %v1122 = vld [vmem:[%s3 + $0x38] sm:$0xff]
    %v1123 = vld [vmem:[%s3 + $0x40] sm:$0xff]
    %v1124 = vld [vmem:[%s3 + $0x48] sm:$0xff]
    %v1125 = vld [vmem:[%s3 + $0x50] sm:$0xff]
    %v1126 = vld [vmem:[%s3 + $0x58] sm:$0xff]
    %v1127 = vld [vmem:[%s3 + $0x60] sm:$0xff]
    %v1128 = vld [vmem:[%s3 + $0x68] sm:$0xff]
    %v1129 = vld [vmem:[%s3 + $0x70] sm:$0xff]
    %v1130 = vld [vmem:[%s3 + $0x78] sm:$0xff]
    %v1131 = vld [vmem:[%s4] sm:$0x1]
    %v1133 = vlaneseq
    %v1134 = vshrl.u32 %v1133, 7
    %v1135 = vsub.s32 0, %v1134
    %v1136 = vrot.slane %v1131, %v1135
    %vm1140 = vcmask 1041409
    %v1141 = vsel %vm1140, %v1114, %v1107
    %1143 = vmatprep.subr.mxu0 0.0
    %1144 = vmatpush1.msra.mxu0 %v1115
    %1145 = vmatprep.subr.mxu0 0.0
    %1146 = vmatpush1.msra.mxu0 %v1116
    %1147 = vmatprep.subr.mxu0 0.0
    %1148 = vmatpush1.msra.mxu0 %v1117
    %1149 = vmatprep.subr.mxu0 0.0
    %1150 = vmatpush1.msra.mxu0 %v1118
    %1151 = vmatprep.subr.mxu0 0.0
    %1152 = vmatpush1.msra.mxu0 %v1119
    %1153 = vmatprep.subr.mxu0 0.0
    %1154 = vmatpush1.msra.mxu0 %v1120
    %1155 = vmatprep.subr.mxu0 0.0
    %1156 = vmatpush1.msra.mxu0 %v1121
    %1157 = vmatprep.subr.mxu0 0.0
    %1158 = vmatpush1.msra.mxu0 %v1122
    %1159 = vmatprep.subr.mxu0 0.0
    %1160 = vmatpush1.msra.mxu0 %v1123
    %1161 = vmatprep.subr.mxu0 0.0
    %1162 = vmatpush1.msra.mxu0 %v1124
    %1163 = vmatprep.subr.mxu0 0.0
    %1164 = vmatpush1.msra.mxu0 %v1125
    %1165 = vmatprep.subr.mxu0 0.0
    %1166 = vmatpush1.msra.mxu0 %v1126
    %1167 = vmatprep.subr.mxu0 0.0
    %1168 = vmatpush1.msra.mxu0 %v1127
    %1169 = vmatprep.subr.mxu0 0.0
    %1170 = vmatpush1.msra.mxu0 %v1128
    %1171 = vmatprep.subr.mxu0 0.0
    %1172 = vmatpush1.msra.mxu0 %v1129
    %1173 = vmatprep.subr.mxu0 0.0
    %1174 = vmatpush1.msra.mxu0 %v1130
    %1175 = vmatprep.subr.mxu0 0.0
    %1176 = vmatpush1.msra.mxu0 0.0
    %1177 = vmatprep.subr.mxu0 0.0
    %1178 = vmatpush1.msra.mxu0 0.0
    %1179 = vmatprep.subr.mxu0 0.0
    %1180 = vmatpush1.msra.mxu0 0.0
    %1181 = vmatprep.subr.mxu0 0.0
    %1182 = vmatpush1.msra.mxu0 0.0
    %1183 = vmatprep.subr.mxu0 0.0
    %1184 = vmatpush1.msra.mxu0 0.0
    %1185 = vmatprep.subr.mxu0 0.0
    %1186 = vmatpush1.msra.mxu0 0.0
    %1187 = vmatprep.subr.mxu0 0.0
    %1188 = vmatpush1.msra.mxu0 0.0
    %1189 = vmatprep.subr.mxu0 0.0
    %1190 = vmatpush1.msra.mxu0 0.0
    %1191 = vmatprep.subr.mxu0 0.0
    %1192 = vmatpush1.msra.mxu0 0.0
    %1193 = vmatprep.subr.mxu0 0.0
    %1194 = vmatpush1.msra.mxu0 0.0
    %1195 = vmatprep.subr.mxu0 0.0
    %1196 = vmatpush1.msra.mxu0 0.0
    %1197 = vmatprep.subr.mxu0 0.0
    %1198 = vmatpush1.msra.mxu0 0.0
    %1199 = vmatprep.subr.mxu0 0.0
    %1200 = vmatpush1.msra.mxu0 0.0
    %1201 = vmatprep.subr.mxu0 0.0
    %1202 = vmatpush1.msra.mxu0 0.0
    %1203 = vmatprep.subr.mxu0 0.0
    %1204 = vmatpush1.msra.mxu0 0.0
    %1205 = vmatprep.subr.mxu0 0.0
    %1206 = vmatpush1.msra.mxu0 0.0
    %1207 = vmatprep.mubr.f32.mxu0 0.0
    %1208 = vmatmul.mubr.f32.gmra.mrb[0].mxu0 %v1141
    %v1209 = vpop.f32.mrb[0].mxu0
    %v1210 = vadd.f32 %v1136, %v1209
    %v1211 = vpop.f32.mrb[0].mxu0
    %1212 = vdwg.mxu0
    %vm1213 = vcmask 25600
    %1214 = vst.msk [vmem:[#allocation2] sm:$0x3] %vm1213, %v1210
    // Predicated region
    $region22: #{forward.1} parent=1 // pred_check
      _
    $region23: #{forward.1} parent=1 // pred_check_branch
      %1216 = sbr.rel (0) target = $region25
    $region24: #{forward.1} parent=1 // pred_region
      %s1218 = ssub.s32 32, 32
      %1219 = vsyncadd [#allocation3], %s1218
      %s1221 = sshll.u32 [#allocation2], 4
      %s1222 = int_to_ptr.vmem [resolvable:$true] %s1221
      %1224 = dma.vmem_to_hbm [thread:$0]  %s1222, 32, %s5, [#allocation3]
    $region25: #{forward.1} parent=1 // pred_fallthru
      _
    // Predicated region
    $region26: #{forward.1} parent=1 // pred_check
      _
    $region27: #{forward.1} parent=1 // pred_check_branch
      %1226 = sbr.rel (0) target = $region29
    $region28: #{forward.1} parent=1 // pred_region
      %1227 = dma.done [#allocation3], 32
    $region29: #{forward.1} parent=1 // pred_fallthru
      _
    %1228 = vsyncpa [#allocation3], 1

</llo_original>
